<compile_context>
chip_gen: v6e
topology: v6e:2x2x1
jax: 0.10.0
libtpu: 0.0.40
codegen_flags: <defaults>
</compile_context>

<pallas_src>
import math
import numpy as np

import jax
import jax.numpy as jnp
from jax.experimental import pallas as pl
from jax.experimental.pallas import tpu as pltpu

# ---- problem sizes (small, consistent with the module) ------------------------
BATCH = 2
SEQ = 16
HIDDEN = 64
HALF = HIDDEN // 2
MAX_LEN = 128  # max_len of the learned position-embedding table


# ----------------------------- in-kernel math -----------------------------------
_A1, _A2, _A3, _A4, _A5 = (0.254829592, -0.284496736, 1.421413741,
                           -1.453152027, 1.061405429)
_PP = 0.3275911
_INV_SQRT2 = 1.0 / math.sqrt(2.0)


def _erf_poly(z):
    """Abramowitz & Stegun 7.1.26 erf approximation, |err| <= 1.5e-7 (f32)."""
    s = jnp.where(z >= 0.0, 1.0, -1.0)
    a = jnp.abs(z)
    t = 1.0 / (1.0 + _PP * a)
    poly = ((((_A5 * t + _A4) * t + _A3) * t + _A2) * t + _A1) * t
    return s * (1.0 - poly * jnp.exp(-(a * a)))


def _gelu_exact(v):
    # nn.GELU() default: exact erf formulation.
    return 0.5 * v * (1.0 + _erf_poly(v * _INV_SQRT2))


# --------------------------------- kernels ---------------------------------------
def _time_embedding_kernel(pos_ref, params_ref, x_ref, t_ref, out_ref):
    # pos_ref:    (1, S, H)      first S rows of the position table
    # params_ref: (3 + H/2, H)   packed [w1_pad; b1_pad; b2; w2]
    # x_ref:      (B, S, H)
    # t_ref:      (B*S, 1)
    # out_ref:    (B, S, H)
    B, S, H = x_ref.shape
    half = params_ref.shape[0] - 3

    x = x_ref[...].astype(jnp.float32)          # (B, S, H)
    pos = pos_ref[...].astype(jnp.float32)      # (1, S, H) -> broadcasts over B
    t = t_ref[...].astype(jnp.float32)          # (B*S, 1)

    p = params_ref[...]                         # single resident VMEM tile
    w1 = p[0:1, 0:half]                         # (1, H/2)
    b1 = p[1:2, 0:half]                         # (1, H/2)
    b2 = p[2:3, :]                              # (1, H)
    w2 = p[3:3 + half, :]                       # (H/2, H)

    # Linear(1 -> H/2): broadcast mul-add on the VPU (no K=1 MXU matmul).
    h = _gelu_exact(t * w1 + b1)                # (B*S, H/2)
    # Linear(H/2 -> H): one small MXU dot, f32 accumulation (un-padded on purpose).
    temporal = jnp.dot(h, w2, preferred_element_type=jnp.float32) + b2   # (B*S, H)

    out_ref[...] = (x + pos + temporal.reshape(B, S, H)).astype(out_ref.dtype)


def _add_pos_kernel_lane_dense(pos_ref, x_ref, out_ref):
    # Lane-dense no-time path: pos_ref (S*H/128, 128); x/out (B*S*H/128, 128).
    reps = x_ref.shape[0] // pos_ref.shape[0]
    pos = jnp.tile(pos_ref[...], (reps, 1)).astype(out_ref.dtype)
    out_ref[...] = x_ref[...].astype(out_ref.dtype) + pos


def _add_pos_kernel(pos_ref, x_ref, out_ref):
    # Fallback no-time path (S*H not a multiple of 128): pos (1,S,H), x/out (B,S,H).
    out_ref[...] = (x_ref[...].astype(out_ref.dtype)
                    + pos_ref[...].astype(out_ref.dtype))


# --------------------------------- wrapper ---------------------------------------
def pack_temporal_params(w1, b1, w2, b2):
    """Pack the temporal-encoder params (stored as (in,out) matrices, i.e. W.T)
    into one (3 + H/2, H) f32 buffer: [w1_pad; b1_pad; b2; w2]. Build ONCE."""
    half, hidden = w2.shape
    assert w1.shape == (1, half) and b1.shape == (1, half) and b2.shape == (1, hidden)

    def pad_h(a):
        return jnp.pad(a.astype(jnp.float32), ((0, 0), (0, hidden - a.shape[1])))

    return jnp.concatenate(
        [pad_h(w1), pad_h(b1), b2.astype(jnp.float32), w2.astype(jnp.float32)],
        axis=0)


def time_embedding(x, pos_emb, packed_params=None, time_values=None, *, donate_x=False):
    """x: (B,S,H); pos_emb: (1,max_len,H); packed_params: output of
    pack_temporal_params (required iff time_values is not None);
    time_values: (B,S,1) or None."""
    B, S, H = x.shape
    out_dtype = jnp.promote_types(x.dtype, pos_emb.dtype)
    cparams = pltpu.CompilerParams(dimension_semantics=("arbitrary",))  # 1-step grid

    # Position-table slice [:, :S, :]: free via BlockSpec when S % 8 == 0;
    # otherwise slice wrapper-side so the block equals the full array extent.
    if S % 8 == 0 and S <= pos_emb.shape[1]:
        pos_in = pos_emb
    else:
        pos_in = pos_emb[:, :S, :]
    pos_spec = pl.BlockSpec((1, S, H), lambda i: (0, 0, 0))

    if time_values is None:
        if (S * H) % 128 == 0:
            rows = (S * H) // 128
            pos2d = pos_in[0, :S, :].reshape(rows, 128)
            x2d = x.reshape(B * rows, 128)           # contiguous -> free view
            io_alias = {1: 0} if (donate_x and x.dtype == out_dtype) else {}
            out2d = pl.pallas_call(
                _add_pos_kernel_lane_dense,
                grid=(1,),
                in_specs=[pl.BlockSpec((rows, 128), lambda i: (0, 0)),
                          pl.BlockSpec((B * rows, 128), lambda i: (0, 0))],
                out_specs=pl.BlockSpec((B * rows, 128), lambda i: (0, 0)),
                out_shape=jax.ShapeDtypeStruct((B * rows, 128), out_dtype),
                compiler_params=cparams,
                input_output_aliases=io_alias,
            )(pos2d, x2d)
            return out2d.reshape(B, S, H)

        io_alias = {1: 0} if (donate_x and x.dtype == out_dtype) else {}
        return pl.pallas_call(
            _add_pos_kernel,
            grid=(1,),
            in_specs=[pos_spec, pl.BlockSpec((B, S, H), lambda i: (0, 0, 0))],
            out_specs=pl.BlockSpec((B, S, H), lambda i: (0, 0, 0)),
            out_shape=jax.ShapeDtypeStruct((B, S, H), out_dtype),
            compiler_params=cparams,
            input_output_aliases=io_alias,
        )(pos_in, x)

    assert packed_params is not None, "pass pack_temporal_params(...) with time_values"
    out_dtype = jnp.promote_types(out_dtype, packed_params.dtype)
    t2d = time_values.reshape(B * S, 1)
    io_alias = {2: 0} if (donate_x and x.dtype == out_dtype) else {}
    return pl.pallas_call(
        _time_embedding_kernel,
        grid=(1,),
        in_specs=[
            pos_spec,
            pl.BlockSpec(packed_params.shape, lambda i: (0, 0)),
            pl.BlockSpec((B, S, H), lambda i: (0, 0, 0)),
            pl.BlockSpec((B * S, 1), lambda i: (0, 0)),
        ],
        out_specs=pl.BlockSpec((B, S, H), lambda i: (0, 0, 0)),
        out_shape=jax.ShapeDtypeStruct((B, S, H), out_dtype),
        compiler_params=cparams,
        input_output_aliases=io_alias,
    )(pos_in, packed_params, x, t2d)


# ---- pure-JAX reference (exact erf GELU, matches the PyTorch module) -------------
def reference(x, pos_emb, w1, b1, w2, b2, time_values=None):
    S = x.shape[1]
    out = x + pos_emb[:, :S, :]
    if time_values is not None:
        h = time_values @ w1 + b1                                  # (B, S, H/2)
        h = 0.5 * h * (1.0 + jax.lax.erf(h / jnp.sqrt(2.0)))       # exact GELU
        out = out + (h @ w2 + b2)                                  # (B, S, H)
    return out


# ------------------------------------ main ----------------------------------------
if __name__ == "__main__":
    key = jax.random.PRNGKey(0)
    ks = jax.random.split(key, 7)

    def rnd(k, shape, scale=0.1):
        return jax.random.normal(k, shape, dtype=jnp.float32) * scale

    # position_embedding is zero-init in the module; random here so the add path
    # is actually exercised.
    pos_emb = rnd(ks[0], (1, MAX_LEN, HIDDEN))
    # nn.Linear weights stored as (in_features, out_features) matrices (== W.T).
    w1 = rnd(ks[1], (1, HALF))
    b1 = rnd(ks[2], (1, HALF))
    w2 = rnd(ks[3], (HALF, HIDDEN))
    b2 = rnd(ks[4], (1, HIDDEN))
    packed = pack_temporal_params(w1, b1, w2, b2)   # built once, reused per call

    x = jax.random.normal(ks[5], (BATCH, SEQ, HIDDEN), dtype=jnp.float32)
    time_values = jax.random.normal(ks[6], (BATCH, SEQ, 1), dtype=jnp.float32)

    # --- full module path (with time_values) ---
    out = jax.block_until_ready(time_embedding(x, pos_emb, packed, time_values))
    ref = reference(x, pos_emb, w1, b1, w2, b2, time_values)
    assert out.shape == (BATCH, SEQ, HIDDEN) and out.dtype == ref.dtype
    np.testing.assert_allclose(np.asarray(out), np.asarray(ref), rtol=1e-4, atol=1e-4)

    # --- time_values=None path (lane-dense add) ---
    out2 = jax.block_until_ready(time_embedding(x, pos_emb, None, None))
    ref2 = reference(x, pos_emb, w1, b1, w2, b2, None)
    assert out2.shape == (BATCH, SEQ, HIDDEN) and out2.dtype == ref2.dtype
    np.testing.assert_allclose(np.asarray(out2), np.asarray(ref2), rtol=1e-4, atol=1e-4)

    print("KERNEL_OK")
</pallas_src>

<mosaic_0001>
module attributes {stable_mosaic.version = 11 : i64} {
  func.func @_time_embedding_kernel(%arg0: i32, %arg1: memref<1x16x64xf32, #tpu.memory_space<vmem>>, %arg2: memref<35x64xf32, #tpu.memory_space<vmem>>, %arg3: memref<2x16x64xf32, #tpu.memory_space<vmem>>, %arg4: memref<32x1xf32, #tpu.memory_space<vmem>>, %arg5: memref<2x16x64xf32, #tpu.memory_space<vmem>>) attributes {dimension_semantics = [#tpu.dimension_semantics<arbitrary>], iteration_bounds = array<i64: 1>, scalar_prefetch = 0 : i64, scratch_operands = 0 : i64, tpu.core_type = #tpu.core_type<tc>, window_params = [{transform_indices = @transform_0, window_bounds = array<i64: 1, 16, 64>}, {pipeline_mode = #tpu.pipeline_mode<synchronous>, transform_indices = @transform_1, window_bounds = array<i64: 35, 64>}, {pipeline_mode = #tpu.pipeline_mode<synchronous>, transform_indices = @transform_2, window_bounds = array<i64: 2, 16, 64>}, {pipeline_mode = #tpu.pipeline_mode<synchronous>, transform_indices = @transform_3, window_bounds = array<i64: 32, 1>}, {pipeline_mode = #tpu.pipeline_mode<synchronous>, transform_indices = @transform_4, window_bounds = array<i64: 2, 16, 64>}]} {
    %c0 = arith.constant 0 : index
    %c0_0 = arith.constant 0 : index
    %c0_1 = arith.constant 0 : index
    %0 = vector.load %arg3[%c0, %c0_0, %c0_1] : memref<2x16x64xf32, #tpu.memory_space<vmem>>, vector<2x16x64xf32>
    %c0_2 = arith.constant 0 : index
    %c0_3 = arith.constant 0 : index
    %c0_4 = arith.constant 0 : index
    %1 = vector.load %arg1[%c0_2, %c0_3, %c0_4] : memref<1x16x64xf32, #tpu.memory_space<vmem>>, vector<1x16x64xf32>
    %c0_5 = arith.constant 0 : index
    %c0_6 = arith.constant 0 : index
    %2 = vector.load %arg4[%c0_5, %c0_6] : memref<32x1xf32, #tpu.memory_space<vmem>>, vector<32x1xf32>
    %c0_7 = arith.constant 0 : index
    %c0_8 = arith.constant 0 : index
    %3 = vector.load %arg2[%c0_7, %c0_8] : memref<35x64xf32, #tpu.memory_space<vmem>>, vector<35x64xf32>
    %4 = vector.extract_strided_slice %3 {offsets = [0, 0], sizes = [1, 32], strides = [1, 1]} : vector<35x64xf32> to vector<1x32xf32>
    %5 = vector.extract_strided_slice %3 {offsets = [1, 0], sizes = [1, 32], strides = [1, 1]} : vector<35x64xf32> to vector<1x32xf32>
    %6 = vector.extract_strided_slice %3 {offsets = [2, 0], sizes = [1, 64], strides = [1, 1]} : vector<35x64xf32> to vector<1x64xf32>
    %7 = vector.extract_strided_slice %3 {offsets = [3, 0], sizes = [32, 64], strides = [1, 1]} : vector<35x64xf32> to vector<32x64xf32>
    %8 = vector.broadcast %2 : vector<32x1xf32> to vector<32x32xf32>
    %9 = vector.broadcast %4 : vector<1x32xf32> to vector<32x32xf32>
    %10 = arith.mulf %8, %9 : vector<32x32xf32>
    %11 = vector.broadcast %5 : vector<1x32xf32> to vector<32x32xf32>
    %12 = arith.addf %10, %11 : vector<32x32xf32>
    %cst = arith.constant 5.000000e-01 : f32
    %13 = vector.broadcast %cst : f32 to vector<32x32xf32>
    %14 = arith.mulf %13, %12 : vector<32x32xf32>
    %cst_9 = arith.constant 0.707106769 : f32
    %15 = vector.broadcast %cst_9 : f32 to vector<32x32xf32>
    %16 = arith.mulf %12, %15 : vector<32x32xf32>
    %cst_10 = arith.constant 0.000000e+00 : f32
    %17 = vector.broadcast %cst_10 : f32 to vector<32x32xf32>
    %18 = arith.cmpf oge, %16, %17 : vector<32x32xf32>
    %cst_11 = arith.constant 1.000000e+00 : f32
    %cst_12 = arith.constant -1.000000e+00 : f32
    %19 = vector.broadcast %cst_11 : f32 to vector<32x32xf32>
    %20 = vector.broadcast %cst_12 : f32 to vector<32x32xf32>
    %21 = arith.select %18, %19, %20 : vector<32x32xi1>, vector<32x32xf32>
    %22 = math.absf %16 : vector<32x32xf32>
    %cst_13 = arith.constant 0.327591091 : f32
    %23 = vector.broadcast %cst_13 : f32 to vector<32x32xf32>
    %24 = arith.mulf %23, %22 : vector<32x32xf32>
    %cst_14 = arith.constant 1.000000e+00 : f32
    %25 = vector.broadcast %cst_14 : f32 to vector<32x32xf32>
    %26 = arith.addf %25, %24 : vector<32x32xf32>
    %cst_15 = arith.constant 1.000000e+00 : f32
    %27 = vector.broadcast %cst_15 : f32 to vector<32x32xf32>
    %28 = arith.divf %27, %26 : vector<32x32xf32>
    %cst_16 = arith.constant 1.06140542 : f32
    %29 = vector.broadcast %cst_16 : f32 to vector<32x32xf32>
    %30 = arith.mulf %29, %28 : vector<32x32xf32>
    %cst_17 = arith.constant -1.45315206 : f32
    %31 = vector.broadcast %cst_17 : f32 to vector<32x32xf32>
    %32 = arith.addf %30, %31 : vector<32x32xf32>
    %33 = arith.mulf %32, %28 : vector<32x32xf32>
    %cst_18 = arith.constant 1.42141378 : f32
    %34 = vector.broadcast %cst_18 : f32 to vector<32x32xf32>
    %35 = arith.addf %33, %34 : vector<32x32xf32>
    %36 = arith.mulf %35, %28 : vector<32x32xf32>
    %cst_19 = arith.constant -0.284496725 : f32
    %37 = vector.broadcast %cst_19 : f32 to vector<32x32xf32>
    %38 = arith.addf %36, %37 : vector<32x32xf32>
    %39 = arith.mulf %38, %28 : vector<32x32xf32>
    %cst_20 = arith.constant 0.254829586 : f32
    %40 = vector.broadcast %cst_20 : f32 to vector<32x32xf32>
    %41 = arith.addf %39, %40 : vector<32x32xf32>
    %42 = arith.mulf %41, %28 : vector<32x32xf32>
    %43 = arith.mulf %22, %22 : vector<32x32xf32>
    %cst_21 = arith.constant 0.000000e+00 : f32
    %44 = vector.broadcast %cst_21 : f32 to vector<32x32xf32>
    %45 = arith.subf %44, %43 : vector<32x32xf32>
    %46 = math.exp %45 : vector<32x32xf32>
    %47 = arith.mulf %42, %46 : vector<32x32xf32>
    %cst_22 = arith.constant 1.000000e+00 : f32
    %48 = vector.broadcast %cst_22 : f32 to vector<32x32xf32>
    %49 = arith.subf %48, %47 : vector<32x32xf32>
    %50 = arith.mulf %21, %49 : vector<32x32xf32>
    %cst_23 = arith.constant 1.000000e+00 : f32
    %51 = vector.broadcast %cst_23 : f32 to vector<32x32xf32>
    %52 = arith.addf %51, %50 : vector<32x32xf32>
    %53 = arith.mulf %14, %52 : vector<32x32xf32>
    %cst_24 = arith.constant dense<0.000000e+00> : vector<32x64xf32>
    %54 = tpu.matmul %53, %7, %cst_24 {dimension_numbers = #tpu.dot_dimension_numbers<[1], [0], [0], [1], [0, 0, 1, 1], [], []>} : vector<32x32xf32>, vector<32x64xf32>, vector<32x64xf32> -> vector<32x64xf32>
    %55 = vector.broadcast %6 : vector<1x64xf32> to vector<32x64xf32>
    %56 = arith.addf %54, %55 : vector<32x64xf32>
    %57 = vector.broadcast %1 : vector<1x16x64xf32> to vector<2x16x64xf32>
    %58 = arith.addf %0, %57 : vector<2x16x64xf32>
    %59 = vector.shape_cast %56 : vector<32x64xf32> to vector<2x16x64xf32>
    %60 = arith.addf %58, %59 : vector<2x16x64xf32>
    %c0_25 = arith.constant 0 : index
    %c0_26 = arith.constant 0 : index
    %c0_27 = arith.constant 0 : index
    %61 = vector.load %arg5[%c0_25, %c0_26, %c0_27] : memref<2x16x64xf32, #tpu.memory_space<vmem>>, vector<2x16x64xf32>
    tpu.vector_store %arg5[%c0_25, %c0_26, %c0_27], %60 {strides = array<i32>} : memref<2x16x64xf32, #tpu.memory_space<vmem>>, vector<2x16x64xf32>,
    return
  }
  func.func @transform_0(%arg0: i32) -> (i32, i32, i32) {
    %c0_i32 = arith.constant 0 : i32
    %c0_i32_0 = arith.constant 0 : i32
    %c0_i32_1 = arith.constant 0 : i32
    %c0_i32_2 = arith.constant 0 : i32
    return %c0_i32, %c0_i32_0, %c0_i32_1 : i32, i32, i32
  }
  func.func @transform_1(%arg0: i32) -> (i32, i32) {
    %c0_i32 = arith.constant 0 : i32
    %c0_i32_0 = arith.constant 0 : i32
    %c0_i32_1 = arith.constant 0 : i32
    return %c0_i32, %c0_i32_0 : i32, i32
  }
  func.func @transform_2(%arg0: i32) -> (i32, i32, i32) {
    %c0_i32 = arith.constant 0 : i32
    %c0_i32_0 = arith.constant 0 : i32
    %c0_i32_1 = arith.constant 0 : i32
    %c0_i32_2 = arith.constant 0 : i32
    return %c0_i32, %c0_i32_0, %c0_i32_1 : i32, i32, i32
  }
  func.func @transform_3(%arg0: i32) -> (i32, i32) {
    %c0_i32 = arith.constant 0 : i32
    %c0_i32_0 = arith.constant 0 : i32
    %c0_i32_1 = arith.constant 0 : i32
    return %c0_i32, %c0_i32_0 : i32, i32
  }
  func.func @transform_4(%arg0: i32) -> (i32, i32, i32) {
    %c0_i32 = arith.constant 0 : i32
    %c0_i32_0 = arith.constant 0 : i32
    %c0_i32_1 = arith.constant 0 : i32
    %c0_i32_2 = arith.constant 0 : i32
    return %c0_i32, %c0_i32_0, %c0_i32_1 : i32, i32, i32
  }
}

</mosaic_0001>

<llo_original>
// kernel: tpu_custom_call.1
$region0: #{tpu_custom_call.1}
  #allocation0 [shape = 'u32[]', space=smem, size = 0x4, offset = 0x4, fixed_abs, tag = 'smem constant byte address 0x4 - core index']
  #allocation1 [shape = 'u32[144,128]{1,0:T(1,128)}', space=vmem, size = 0x12000, scoped, tag = 'internal scratch']
  %s0 = inlined_call_operand.vmem [shape: f32[1,128,64], index: 0, kind: input, shape index: {}]
  %s1 = inlined_call_operand.vmem [shape: f32[35,64], index: 1, kind: input, shape index: {}]
  %s2 = inlined_call_operand.vmem [shape: f32[2,16,64], index: 2, kind: input, shape index: {}]
  %s3 = inlined_call_operand.vmem [shape: f32[32,1], index: 3, kind: input, shape index: {}]
  %s4 = inlined_call_operand.hbm [shape: f32[2,16,64], index: 4, kind: output, shape index: {}]
  %s5 = sld [smem:[#allocation0]]
  $region26: #{tpu_custom_call.1} parent=0
    _
  %s7 = ssub.s32 1, %s5
  %s8 = scalar_select 0, %s7, %s5
  $region1: #{tpu_custom_call.1} parent=0
    #allocation2 [shape = 'u8[16384]{0}', space=vmem, size = 0x4000, scoped, tag = 'output window, operand 0, single buffered']
    #allocation3 [shape = 's32[1]{0}', space=sflag, size = 0x4, scoped, tag = 'scoped memory for tpu_custom_call.1']
    %9 = vsyncpa [#allocation3], 0
    // Predicated region
    $region2: #{tpu_custom_call.1} parent=1 // pred_check
      _
    $region3: #{tpu_custom_call.1} parent=1 // pred_check_branch
      %11 = sbr.rel (0) target = $region5
    $region4: #{tpu_custom_call.1} parent=1 // pred_region
      _
    $region5: #{tpu_custom_call.1} parent=1 // pred_fallthru
      _
    // Predicated region
    $region6: #{tpu_custom_call.1} parent=1 // pred_check
      _
    $region7: #{tpu_custom_call.1} parent=1 // pred_check_branch
      %13 = sbr.rel (0) target = $region9
    $region8: #{tpu_custom_call.1} parent=1 // pred_region
      _
    $region9: #{tpu_custom_call.1} parent=1 // pred_fallthru
      _
    // Predicated region
    $region10: #{tpu_custom_call.1} parent=1 // pred_check
      _
    $region11: #{tpu_custom_call.1} parent=1 // pred_check_branch
      %15 = sbr.rel (0) target = $region13
    $region12: #{tpu_custom_call.1} parent=1 // pred_region
      _
    $region13: #{tpu_custom_call.1} parent=1 // pred_fallthru
      _
    // Predicated region
    $region14: #{tpu_custom_call.1} parent=1 // pred_check
      _
    $region15: #{tpu_custom_call.1} parent=1 // pred_check_branch
      %17 = sbr.rel (0) target = $region17
    $region16: #{tpu_custom_call.1} parent=1 // pred_region
      _
    $region17: #{tpu_custom_call.1} parent=1 // pred_fallthru
      _
    %v18 = vld [vmem:[%s2] sm:$0xff]
    %v19 = vld [vmem:[%s2 + $0x8] sm:$0xff]
    %v20 = vld [vmem:[%s2 + $0x10] sm:$0xff]
    %v21 = vld [vmem:[%s2 + $0x18] sm:$0xff]
    %v22 = vld [vmem:[%s0] sm:$0xff]
    %v23 = vld [vmem:[%s0 + $0x8] sm:$0xff]
    %v24 = vld [vmem:[%s3] sm:$0xff]
    %v25 = vld [vmem:[%s3 + $0x8] sm:$0xff]
    %v26 = vld [vmem:[%s3 + $0x10] sm:$0xff]
    %v27 = vld [vmem:[%s3 + $0x18] sm:$0xff]
    %v28 = vld [vmem:[%s1] sm:$0xff]
    %v29 = vld [vmem:[%s1 + $0x8] sm:$0xff]
    %v30 = vld [vmem:[%s1 + $0x10] sm:$0xff]
    %v31 = vld [vmem:[%s1 + $0x18] sm:$0xff]
    %v32 = vld [vmem:[%s1 + $0x20] sm:$0x7]
    %34 = vset.pattern.permute.xlu0 0
    %35 = vperm.xlu0 %34, %v24
    %v36 = vpop.permute.xlu0 %35
    %39 = vset.pattern.permute.xlu0 0
    %40 = vperm.xlu0 %39, %v25
    %v41 = vpop.permute.xlu0 %40
    %44 = vset.pattern.permute.xlu0 0
    %45 = vperm.xlu0 %44, %v26
    %v46 = vpop.permute.xlu0 %45
    %49 = vset.pattern.permute.xlu0 0
    %50 = vperm.xlu0 %49, %v27
    %v51 = vpop.permute.xlu0 %50
    %v53 = vlaneseq
    %v54 = vshrl.u32 %v53, 7
    %v55 = vsub.s32 0, %v54
    %v56 = vrot.slane %v28, %v55
    %v57 = vmul.f32 %v36, %v56
    %v58 = vmul.f32 %v41, %v56
    %v59 = vmul.f32 %v46, %v56
    %v60 = vmul.f32 %v51, %v56
    %v61 = vlaneseq
    %v62 = vshrl.u32 %v61, 7
    %v63 = vsub.s32 1, %v62
    %v64 = vrot.slane %v28, %v63
    %v65 = vadd.f32 %v57, %v64
    %v66 = vadd.f32 %v58, %v64
    %v67 = vadd.f32 %v59, %v64
    %v68 = vadd.f32 %v60, %v64
    %v69 = vmul.f32 %v65, 0.5
    %v70 = vmul.f32 %v66, 0.5
    %v71 = vmul.f32 %v67, 0.5
    %v72 = vmul.f32 %v68, 0.5
    %v73 = vmul.f32 %v65, 0.70710677
    %v74 = vmul.f32 %v66, 0.70710677
    %v75 = vmul.f32 %v67, 0.70710677
    %v76 = vmul.f32 %v68, 0.70710677
    %vm77 = vcmp.ge.f32.partialorder %v73, 0.0
    %vm78 = vcmp.ge.f32.partialorder %v74, 0.0
    %vm79 = vcmp.ge.f32.partialorder %v75, 0.0
    %vm80 = vcmp.ge.f32.partialorder %v76, 0.0
    %v81 = vsel %vm77, 1.0, -1.0
    %v82 = vsel %vm78, 1.0, -1.0
    %v83 = vsel %vm79, 1.0, -1.0
    %v84 = vsel %vm80, 1.0, -1.0
    %v85 = vand.u32 2147483647, %v73
    %v86 = vand.u32 2147483647, %v74
    %v87 = vand.u32 2147483647, %v75
    %v88 = vand.u32 2147483647, %v76
    %v89 = vmul.f32 %v85, 0.3275911
    %v90 = vmul.f32 %v86, 0.3275911
    %v91 = vmul.f32 %v87, 0.3275911
    %v92 = vmul.f32 %v88, 0.3275911
    %v93 = vadd.f32 %v89, 1.0
    %v94 = vadd.f32 %v90, 1.0
    %v95 = vadd.f32 %v91, 1.0
    %v96 = vadd.f32 %v92, 1.0
    %v97 = vrcp.pop %v93
    %v98 = vmul.f32 1.0, %v97
    %v99 = vrcp.pop %v94
    %v100 = vmul.f32 1.0, %v99
    %v101 = vrcp.pop %v95
    %v102 = vmul.f32 1.0, %v101
    %v103 = vrcp.pop %v96
    %v104 = vmul.f32 1.0, %v103
    %v105 = vmul.f32 %v98, 1.0614054
    %v106 = vmul.f32 %v100, 1.0614054
    %v107 = vmul.f32 %v102, 1.0614054
    %v108 = vmul.f32 %v104, 1.0614054
    %v109 = vadd.f32 %v105, -1.4531521
    %v110 = vadd.f32 %v106, -1.4531521
    %v111 = vadd.f32 %v107, -1.4531521
    %v112 = vadd.f32 %v108, -1.4531521
    %v113 = vmul.f32 %v109, %v98
    %v114 = vmul.f32 %v110, %v100
    %v115 = vmul.f32 %v111, %v102
    %v116 = vmul.f32 %v112, %v104
    %v117 = vadd.f32 %v113, 1.4214138
    %v118 = vadd.f32 %v114, 1.4214138
    %v119 = vadd.f32 %v115, 1.4214138
    %v120 = vadd.f32 %v116, 1.4214138
    %v121 = vmul.f32 %v117, %v98
    %v122 = vmul.f32 %v118, %v100
    %v123 = vmul.f32 %v119, %v102
    %v124 = vmul.f32 %v120, %v104
    %v125 = vadd.f32 %v121, -0.28449672
    %v126 = vadd.f32 %v122, -0.28449672
    %v127 = vadd.f32 %v123, -0.28449672
    %v128 = vadd.f32 %v124, -0.28449672
    %v129 = vmul.f32 %v125, %v98
    %v130 = vmul.f32 %v126, %v100
    %v131 = vmul.f32 %v127, %v102
    %v132 = vmul.f32 %v128, %v104
    %v133 = vadd.f32 %v129, 0.2548296
    %v134 = vadd.f32 %v130, 0.2548296
    %v135 = vadd.f32 %v131, 0.2548296
    %v136 = vadd.f32 %v132, 0.2548296
    %v137 = vmul.f32 %v133, %v98
    %v138 = vmul.f32 %v134, %v100
    %v139 = vmul.f32 %v135, %v102
    %v140 = vmul.f32 %v136, %v104
    %v141 = vmul.f32 %v85, %v85
    %v142 = vmul.f32 %v86, %v86
    %v143 = vmul.f32 %v87, %v87
    %v144 = vmul.f32 %v88, %v88
    %v145 = vsub.f32 0.0, %v141
    %v146 = vsub.f32 0.0, %v142
    %v147 = vsub.f32 0.0, %v143
    %v148 = vsub.f32 0.0, %v144
    %v149 = vmul.f32 %v145, 1.442695
    %v150 = vpow.pop %v149
    %v151 = vmul.f32 %v146, 1.442695
    %v152 = vpow.pop %v151
    %v153 = vmul.f32 %v147, 1.442695
    %v154 = vpow.pop %v153
    %v155 = vmul.f32 %v148, 1.442695
    %v156 = vpow.pop %v155
    %v157 = vmul.f32 %v137, %v150
    %v158 = vmul.f32 %v138, %v152
    %v159 = vmul.f32 %v139, %v154
    %v160 = vmul.f32 %v140, %v156
    %v161 = vsub.f32 1.0, %v157
    %v162 = vsub.f32 1.0, %v158
    %v163 = vsub.f32 1.0, %v159
    %v164 = vsub.f32 1.0, %v160
    %v165 = vmul.f32 %v81, %v161
    %v166 = vmul.f32 %v82, %v162
    %v167 = vmul.f32 %v83, %v163
    %v168 = vmul.f32 %v84, %v164
    %v169 = vadd.f32 %v165, 1.0
    %v170 = vadd.f32 %v166, 1.0
    %v171 = vadd.f32 %v167, 1.0
    %v172 = vadd.f32 %v168, 1.0
    %v173 = vmul.f32 %v69, %v169
    %v174 = vmul.f32 %v70, %v170
    %v175 = vmul.f32 %v71, %v171
    %v176 = vmul.f32 %v72, %v172
    %v177 = vlaneseq
    %v178 = vshrl.u32 %v177, 7
    %v179 = vsub.s32 2, %v178
    %v180 = vrot.slane %v28, %v179
    %vm186 = vcmask 1044480
    %v187 = vrot.slane %v28, 3
    %v188 = vrot.slane %v29, 3
    %v189 = vsel %vm186, %v187, %v188
    %v190 = vrot.slane %v30, 3
    %v191 = vsel %vm186, %v188, %v190
    %v192 = vrot.slane %v31, 3
    %v193 = vsel %vm186, %v190, %v192
    %v194 = vrot.slane %v32, 3
    %v195 = vsel %vm186, %v192, %v194
    %vm200 = vcmask 261120
    %v202 = vsel %vm200, %v173, 0
    %v205 = vsel %vm200, %v174, 0
    %v208 = vsel %vm200, %v175, 0
    %v211 = vsel %vm200, %v176, 0
    %213 = vmatprep.subr.mxu0 0.0
    %214 = vmatpush1.msra.mxu0 0.0
    %215 = vmatprep.subr.mxu0 0.0
    %216 = vmatpush1.msra.mxu0 0.0
    %217 = vmatprep.subr.mxu0 0.0
    %218 = vmatpush1.msra.mxu0 0.0
    %219 = vmatprep.subr.mxu0 0.0
    %220 = vmatpush1.msra.mxu0 0.0
    %221 = vmatprep.subr.mxu0 0.0
    %222 = vmatpush1.msra.mxu0 0.0
    %223 = vmatprep.subr.mxu0 0.0
    %224 = vmatpush1.msra.mxu0 0.0
    %225 = vmatprep.subr.mxu0 0.0
    %226 = vmatpush1.msra.mxu0 0.0
    %227 = vmatprep.subr.mxu0 0.0
    %228 = vmatpush1.msra.mxu0 0.0
    %229 = vmatprep.subr.mxu0 0.0
    %230 = vmatpush1.msra.mxu0 0.0
    %231 = vmatprep.subr.mxu0 0.0
    %232 = vmatpush1.msra.mxu0 0.0
    %233 = vmatprep.subr.mxu0 0.0
    %234 = vmatpush1.msra.mxu0 0.0
    %235 = vmatprep.subr.mxu0 0.0
    %236 = vmatpush1.msra.mxu0 0.0
    %237 = vmatprep.subr.mxu0 0.0
    %238 = vmatpush1.msra.mxu0 %v195
    %239 = vmatprep.subr.mxu0 0.0
    %240 = vmatpush1.msra.mxu0 %v193
    %241 = vmatprep.subr.mxu0 0.0
    %242 = vmatpush1.msra.mxu0 %v191
    %243 = vmatprep.subr.mxu0 0.0
    %244 = vmatpush1.msra.mxu0 %v189
    %245 = vmatprep.subr.mxu0 0.0
    %246 = vmatpush2.msra.mxu0 0.0
    %247 = vmatprep.subr.mxu0 0.0
    %248 = vmatpush2.msra.mxu0 0.0
    %249 = vmatprep.subr.mxu0 0.0
    %250 = vmatpush2.msra.mxu0 0.0
    %251 = vmatprep.subr.mxu0 0.0
    %252 = vmatpush2.msra.mxu0 0.0
    %253 = vmatprep.subr.mxu0 0.0
    %254 = vmatpush2.msra.mxu0 0.0
    %255 = vmatprep.subr.mxu0 0.0
    %256 = vmatpush2.msra.mxu0 0.0
    %257 = vmatprep.subr.mxu0 0.0
    %258 = vmatpush2.msra.mxu0 0.0
    %259 = vmatprep.subr.mxu0 0.0
    %260 = vmatpush2.msra.mxu0 0.0
    %261 = vmatprep.subr.mxu0 0.0
    %262 = vmatpush2.msra.mxu0 0.0
    %263 = vmatprep.subr.mxu0 0.0
    %264 = vmatpush2.msra.mxu0 0.0
    %265 = vmatprep.subr.mxu0 0.0
    %266 = vmatpush2.msra.mxu0 0.0
    %267 = vmatprep.subr.mxu0 0.0
    %268 = vmatpush2.msra.mxu0 0.0
    %269 = vmatprep.subr.mxu0 0.0
    %270 = vmatpush2.msra.mxu0 0.0
    %271 = vmatprep.subr.mxu0 0.0
    %272 = vmatpush2.msra.mxu0 0.0
    %273 = vmatprep.subr.mxu0 0.0
    %274 = vmatpush2.msra.mxu0 0.0
    %275 = vmatprep.subr.mxu0 0.0
    %276 = vmatpush2.msra.mxu0 0.0
    %277 = vmatprep.mubr.f32.mxu0 0.0
    %278 = vmatmul.mubr.f32.gmra.mxu0 %v202
    %v279 = vpop.f32.mrf.mxu0
    %v280 = vadd.f32 %v180, %v279
    %v281 = vpop.f32.mrf.mxu0
    %282 = vmatprep.mubr.f32.mxu0 0.0
    %283 = vmatmul.mubr.f32.gmra.mxu0 %v205
    %v284 = vpop.f32.mrf.mxu0
    %v285 = vadd.f32 %v180, %v284
    %v286 = vpop.f32.mrf.mxu0
    %287 = vmatprep.mubr.f32.mxu0 0.0
    %288 = vmatmul.mubr.f32.gmra.mxu0 %v208
    %v289 = vpop.f32.mrf.mxu0
    %v290 = vadd.f32 %v180, %v289
    %v291 = vpop.f32.mrf.mxu0
    %292 = vmatprep.mubr.f32.mxu0 0.0
    %293 = vmatmul.mubr.f32.gmra.mxu0 %v211
    %v294 = vpop.f32.mrf.mxu0
    %v295 = vadd.f32 %v180, %v294
    %v296 = vpop.f32.mrf.mxu0
    %297 = vdwg.mxu0
    %v298 = vadd.f32 %v18, %v22
    %v299 = vadd.f32 %v19, %v23
    %v300 = vadd.f32 %v20, %v22
    %v301 = vadd.f32 %v21, %v23
    %v302 = vadd.f32 %v298, %v280
    %v303 = vadd.f32 %v299, %v285
    %v304 = vadd.f32 %v300, %v290
    %v305 = vadd.f32 %v301, %v295
    %vm306 = vcmask 523264
    %307 = vst.msk [vmem:[#allocation2] sm:$0xff] %vm306, %v302
    %308 = vst.msk [vmem:[#allocation2 + $0x8] sm:$0xff] %vm306, %v303
    %309 = vst.msk [vmem:[#allocation2 + $0x10] sm:$0xff] %vm306, %v304
    %310 = vst.msk [vmem:[#allocation2 + $0x18] sm:$0xff] %vm306, %v305
    // Predicated region
    $region18: #{tpu_custom_call.1} parent=1 // pred_check
      _
    $region19: #{tpu_custom_call.1} parent=1 // pred_check_branch
      %312 = sbr.rel (0) target = $region21
    $region20: #{tpu_custom_call.1} parent=1 // pred_region
      %s314 = ssub.s32 512, 512
      %315 = vsyncadd [#allocation3], %s314
      %s316 = sshll.u32 [#allocation2], 4
      %s317 = int_to_ptr.vmem [resolvable:$true] %s316
      %322 = dma.vmem_to_hbm [thread:$0]  %s317, 512, %s4, [#allocation3], 128, 128, 8
    $region21: #{tpu_custom_call.1} parent=1 // pred_fallthru
      _
    // Predicated region
    $region22: #{tpu_custom_call.1} parent=1 // pred_check
      _
    $region23: #{tpu_custom_call.1} parent=1 // pred_check_branch
      %324 = sbr.rel (0) target = $region25
    $region24: #{tpu_custom_call.1} parent=1 // pred_region
      %325 = dma.done [#allocation3], 512
    $region25: #{tpu_custom_call.1} parent=1 // pred_fallthru
      _
    %326 = vsyncpa [#allocation3], 1

</llo_original>
